<compile_context>
chip_gen: v7x
topology: tpu7x:2x2x1
jax: 0.10.0
libtpu: 0.0.40
codegen_flags: <defaults>
</compile_context>

<pallas_src>
import jax
import jax.numpy as jnp
from jax import lax
from jax.experimental import pallas as pl
from jax.experimental.pallas import tpu as pltpu

EPS = 1e-5
NEG_SLOPE = 0.1


def _round_up(x, m):
    return ((x + m - 1) // m) * m


# ---------- Phase 1: conv matmul (MXU) + per-tile per-channel sum / sumsq ----------
def _conv_stats_kernel(p_ref, w_ref, y_ref, stats_ref):
    # p_ref: (TILE_M, K_pad) bf16/f32 patches; w_ref: (K_pad, C_pad)
    # y_ref: (TILE_M, C_pad) f32 pre-BN conv output (written back to HBM for phase 2)
    # stats_ref: (8, C_pad) f32 per-tile stats; row 0 = sum, row 1 = sum of squares
    y = jnp.dot(p_ref[...], w_ref[...], preferred_element_type=jnp.float32)
    y_ref[...] = y
    c = y.shape[1]
    s = jnp.sum(y, axis=0, keepdims=True)           # (1, C_pad)
    sq = jnp.sum(y * y, axis=0, keepdims=True)      # (1, C_pad)
    stats_ref[...] = jnp.concatenate(
        [s, sq, jnp.zeros((6, c), jnp.float32)], axis=0)


# ---------- Phase 2: folded BatchNorm affine + LeakyReLU (1 FMA + select / elem) ----------
def _bn_lrelu_kernel(y_ref, scale_ref, shift_ref, o_ref):
    z = y_ref[...] * scale_ref[...] + shift_ref[...]
    o_ref[...] = jnp.where(z >= 0, z, NEG_SLOPE * z)


def cnn2d_block(x, w, b, gamma, beta, *, stride=(1, 2), dilation=(1, 1),
                use_bf16_matmul=True, tile_m=512):
    """x: (N, C_in, H, W) f32, w: (C_out, C_in, KH, KW), b/gamma/beta: (C_out,)."""
    del b  # conv bias is exactly cancelled by training-mode BatchNorm mean subtraction
    N, C_in, H, W = x.shape
    C_out, _, KH, KW = w.shape
    sh, sw = stride
    dh, dw = dilation
    H_out = (H - dh * (KH - 1) - 1) // sh + 1
    W_out = (W - dw * (KW - 1) - 1) // sw + 1

    M = N * H_out * W_out
    K = C_in * KH * KW

    # Lane/sublane-aligned, MXU-friendly padded sizes.
    K_pad = _round_up(K, 128)
    C_pad = _round_up(max(C_out, 128), 128)
    TILE_M = min(tile_m, _round_up(M, 16))          # 16-aligned (bf16 sublane packing)
    M_pad = _round_up(M, TILE_M)
    n_tiles = M_pad // TILE_M

    # ---- im2col in NHWC order (layout glue; patches written channel-contiguous) ----
    # TODO(synk): fold patch extraction into the kernel (KH*KW shifted matmuls on the
    # raw NHWC tile) to avoid materializing the ~35x-expanded im2col matrix in HBM.
    x_nhwc = jnp.transpose(x, (0, 2, 3, 1))         # (N, H, W, C_in) — small transpose
    taps = []
    for kh in range(KH):
        for kw in range(KW):
            h0, w0 = kh * dh, kw * dw
            taps.append(x_nhwc[:, h0:h0 + (H_out - 1) * sh + 1:sh,
                                  w0:w0 + (W_out - 1) * sw + 1:sw, :])
    patches = jnp.stack(taps, axis=-1)              # (N, Ho, Wo, C_in, KH*KW)
    patches = patches.reshape(M, K)                 # K-order = (c_in, kh, kw)
    w_mat = w.reshape(C_out, K).T                   # (K, C_out), same K ordering

    mm_dtype = jnp.bfloat16 if use_bf16_matmul else jnp.float32
    patches_p = jnp.pad(patches, ((0, M_pad - M), (0, K_pad - K))).astype(mm_dtype)
    w_p = jnp.pad(w_mat, ((0, K_pad - K), (0, C_pad - C_out))).astype(mm_dtype)

    cparams = pltpu.CompilerParams(
        dimension_semantics=("parallel",),          # M-tiles independent -> megacore on v7x
        vmem_limit_bytes=32 * 1024 * 1024)          # safe on v5e/v6e (128 MiB) and v7x (64 MiB)

    itemsize = jnp.dtype(mm_dtype).itemsize
    cost1 = pl.CostEstimate(
        flops=2 * M_pad * K_pad * C_pad,
        transcendentals=0,
        bytes_accessed=(M_pad * K_pad * itemsize + K_pad * C_pad * itemsize
                        + M_pad * C_pad * 4 + n_tiles * 8 * C_pad * 4))

    y_pre, stats = pl.pallas_call(
        _conv_stats_kernel,
        out_shape=(jax.ShapeDtypeStruct((M_pad, C_pad), jnp.float32),
                   jax.ShapeDtypeStruct((n_tiles * 8, C_pad), jnp.float32)),
        grid=(n_tiles,),
        in_specs=[pl.BlockSpec((TILE_M, K_pad), lambda i: (i, 0)),
                  pl.BlockSpec((K_pad, C_pad), lambda i: (0, 0))],   # weights resident
        out_specs=(pl.BlockSpec((TILE_M, C_pad), lambda i: (i, 0)),
                   pl.BlockSpec((8, C_pad), lambda i: (i, 0))),
        compiler_params=cparams,
        cost_estimate=cost1,
    )(patches_p, w_p)

    # ---- tiny cross-tile reduction + BN scale/shift folding (C_pad scalars, plain JAX) ----
    tot = jnp.sum(stats.reshape(n_tiles, 8, C_pad), axis=0)          # (8, C_pad)
    mean = tot[0] / M                                                # zero-padded rows add 0
    var = jnp.maximum(tot[1] / M - mean * mean, 0.0)                 # biased variance
    inv_std = lax.rsqrt(var + EPS)
    gamma_p = jnp.pad(gamma.astype(jnp.float32), (0, C_pad - C_out))
    beta_p = jnp.pad(beta.astype(jnp.float32), (0, C_pad - C_out))
    scale = (gamma_p * inv_std).reshape(1, C_pad)
    shift = (beta_p - mean * gamma_p * inv_std).reshape(1, C_pad)

    cost2 = pl.CostEstimate(
        flops=3 * M_pad * C_pad, transcendentals=0,
        bytes_accessed=2 * M_pad * C_pad * 4 + 2 * C_pad * 4)

    out_flat = pl.pallas_call(
        _bn_lrelu_kernel,
        out_shape=jax.ShapeDtypeStruct((M_pad, C_pad), jnp.float32),
        grid=(n_tiles,),
        in_specs=[pl.BlockSpec((TILE_M, C_pad), lambda i: (i, 0)),
                  pl.BlockSpec((1, C_pad), lambda i: (0, 0)),
                  pl.BlockSpec((1, C_pad), lambda i: (0, 0))],
        out_specs=pl.BlockSpec((TILE_M, C_pad), lambda i: (i, 0)),
        compiler_params=cparams,
        cost_estimate=cost2,
    )(y_pre, scale, shift)

    # Strip padding, back to NCHW.
    out = out_flat[:M, :C_out].reshape(N, H_out, W_out, C_out)
    return out.transpose(0, 3, 1, 2)


def cnn2d_block_reference(x, w, b, gamma, beta, *, stride=(1, 2), dilation=(1, 1)):
    y = lax.conv_general_dilated(
        x, w, window_strides=stride, padding="VALID", rhs_dilation=dilation,
        dimension_numbers=("NCHW", "OIHW", "NCHW"))
    y = y + b.reshape(1, -1, 1, 1)
    mean = y.mean(axis=(0, 2, 3), keepdims=True)
    var = jnp.square(y - mean).mean(axis=(0, 2, 3), keepdims=True)
    y = (y - mean) / jnp.sqrt(var + EPS)
    y = y * gamma.reshape(1, -1, 1, 1) + beta.reshape(1, -1, 1, 1)
    return jnp.where(y >= 0, y, NEG_SLOPE * y)


if __name__ == "__main__":
    # Small shapes consistent with the module: NCHW input.
    N, C_in, C_out = 2, 4, 8
    H, W = 16, 16
    KH, KW = 5, 7
    stride, dilation = (1, 2), (1, 1)

    key = jax.random.PRNGKey(0)
    kx, kw_, kb = jax.random.split(key, 3)
    x = jax.random.normal(kx, (N, C_in, H, W), dtype=jnp.float32)

    # PyTorch-like init: conv weight/bias ~ U(-bound, bound); BN gamma=1, beta=0.
    fan_in = C_in * KH * KW
    bound = 1.0 / (fan_in ** 0.5)
    w = jax.random.uniform(kw_, (C_out, C_in, KH, KW), jnp.float32, -bound, bound)
    b = jax.random.uniform(kb, (C_out,), jnp.float32, -bound, bound)
    gamma = jnp.ones((C_out,), jnp.float32)
    beta = jnp.zeros((C_out,), jnp.float32)

    ref = cnn2d_block_reference(x, w, b, gamma, beta, stride=stride, dilation=dilation)
    expected_shape = (N, C_out, H - KH + 1, (W - KW) // 2 + 1)

    # f32-MXU path: tight numerical check.
    out_f32 = jax.block_until_ready(
        cnn2d_block(x, w, b, gamma, beta, stride=stride, dilation=dilation,
                    use_bf16_matmul=False))
    assert out_f32.shape == expected_shape, out_f32.shape
    assert jnp.allclose(out_f32, ref, atol=1e-4, rtol=1e-4), "f32 mismatch vs reference"

    # bf16-MXU path (default; recommended on v6e/v7x): looser check (bf16 conv inputs).
    out_bf16 = jax.block_until_ready(
        cnn2d_block(x, w, b, gamma, beta, stride=stride, dilation=dilation))
    assert out_bf16.shape == expected_shape, out_bf16.shape
    assert jnp.allclose(out_bf16, ref, atol=2e-2, rtol=2e-2), "bf16 mismatch vs reference"

    print("KERNEL_OK")
</pallas_src>

<mosaic_0001>
module attributes {stable_mosaic.version = 11 : i64} {
  func.func @_conv_stats_kernel(%arg0: i32, %arg1: memref<128x256xf32, #tpu.memory_space<vmem>>, %arg2: memref<256x128xf32, #tpu.memory_space<vmem>>, %arg3: memref<128x128xf32, #tpu.memory_space<vmem>>, %arg4: memref<8x128xf32, #tpu.memory_space<vmem>>) attributes {dimension_semantics = [#tpu.dimension_semantics<parallel>], iteration_bounds = array<i64: 1>, scalar_prefetch = 0 : i64, scratch_operands = 0 : i64, tpu.core_type = #tpu.core_type<tc>, window_params = [{transform_indices = @transform_0, window_bounds = array<i64: 128, 256>}, {pipeline_mode = #tpu.pipeline_mode<synchronous>, transform_indices = @transform_1, window_bounds = array<i64: 256, 128>}, {transform_indices = @transform_2, window_bounds = array<i64: 128, 128>}, {transform_indices = @transform_3, window_bounds = array<i64: 8, 128>}]} {
    %c0 = arith.constant 0 : index
    %c0_0 = arith.constant 0 : index
    %0 = vector.load %arg1[%c0, %c0_0] : memref<128x256xf32, #tpu.memory_space<vmem>>, vector<128x256xf32>
    %c0_1 = arith.constant 0 : index
    %c0_2 = arith.constant 0 : index
    %1 = vector.load %arg2[%c0_1, %c0_2] : memref<256x128xf32, #tpu.memory_space<vmem>>, vector<256x128xf32>
    %cst = arith.constant dense<0.000000e+00> : vector<128x128xf32>
    %2 = tpu.matmul %0, %1, %cst {dimension_numbers = #tpu.dot_dimension_numbers<[1], [0], [0], [1], [0, 0, 1, 1], [], []>} : vector<128x256xf32>, vector<256x128xf32>, vector<128x128xf32> -> vector<128x128xf32>
    %c0_3 = arith.constant 0 : index
    %c0_4 = arith.constant 0 : index
    %3 = vector.load %arg3[%c0_3, %c0_4] : memref<128x128xf32, #tpu.memory_space<vmem>>, vector<128x128xf32>
    tpu.vector_store %arg3[%c0_3, %c0_4], %2 {strides = array<i32>} : memref<128x128xf32, #tpu.memory_space<vmem>>, vector<128x128xf32>,
    %cst_5 = arith.constant dense<0.000000e+00> : vector<128xf32>
    %4 = vector.multi_reduction <add>, %2, %cst_5 [0] : vector<128x128xf32> to vector<128xf32>
    %5 = vector.shape_cast %4 : vector<128xf32> to vector<1x128xf32>
    %6 = arith.mulf %2, %2 : vector<128x128xf32>
    %cst_6 = arith.constant dense<0.000000e+00> : vector<128xf32>
    %7 = vector.multi_reduction <add>, %6, %cst_6 [0] : vector<128x128xf32> to vector<128xf32>
    %8 = vector.shape_cast %7 : vector<128xf32> to vector<1x128xf32>
    %cst_7 = arith.constant 0.000000e+00 : f32
    %9 = vector.broadcast %cst_7 : f32 to vector<6x128xf32>
    %10 = tpu.concatenate %5, %8, %9 in 0 : vector<1x128xf32>, vector<1x128xf32>, vector<6x128xf32> -> vector<8x128xf32>
    %c0_8 = arith.constant 0 : index
    %c0_9 = arith.constant 0 : index
    %11 = vector.load %arg4[%c0_8, %c0_9] : memref<8x128xf32, #tpu.memory_space<vmem>>, vector<8x128xf32>
    tpu.vector_store %arg4[%c0_8, %c0_9], %10 {strides = array<i32>} : memref<8x128xf32, #tpu.memory_space<vmem>>, vector<8x128xf32>,
    return
  }
  func.func @transform_0(%arg0: i32) -> (i32, i32) {
    %c0_i32 = arith.constant 0 : i32
    %c0_i32_0 = arith.constant 0 : i32
    return %arg0, %c0_i32 : i32, i32
  }
  func.func @transform_1(%arg0: i32) -> (i32, i32) {
    %c0_i32 = arith.constant 0 : i32
    %c0_i32_0 = arith.constant 0 : i32
    %c0_i32_1 = arith.constant 0 : i32
    return %c0_i32, %c0_i32_0 : i32, i32
  }
  func.func @transform_2(%arg0: i32) -> (i32, i32) {
    %c0_i32 = arith.constant 0 : i32
    %c0_i32_0 = arith.constant 0 : i32
    return %arg0, %c0_i32 : i32, i32
  }
  func.func @transform_3(%arg0: i32) -> (i32, i32) {
    %c0_i32 = arith.constant 0 : i32
    %c0_i32_0 = arith.constant 0 : i32
    return %arg0, %c0_i32 : i32, i32
  }
}

</mosaic_0001>

<llo_original>
// kernel: tpu_custom_call.1
$region0: #{tpu_custom_call.1}
  #allocation0 [shape = 'u32[]', space=smem, size = 0x4, offset = 0x4, fixed_abs, tag = 'smem constant byte address 0x4 - core index']
  #allocation1 [shape = 'u32[144,128]{1,0:T(1,128)}', space=vmem, size = 0x12000, scoped, tag = 'internal scratch']
  %s0 = inlined_call_operand.hbm [shape: f32[128,256], index: 0, kind: input, shape index: {}]
  %s1 = inlined_call_operand.hbm [shape: f32[256,128], index: 1, kind: input, shape index: {}]
  %s2 = inlined_call_operand.hbm [shape: f32[128,128], index: 2, kind: output, shape index: {0}]
  %s3 = inlined_call_operand.hbm [shape: f32[8,128], index: 3, kind: output, shape index: {1}]
  %4 = xla_tuple %s2, %s3
  %s5 = sld [smem:[#allocation0]]
  $region34: #{tpu_custom_call.1} parent=0
    _
  %s7 = ssub.s32 1, %s5
  %s8 = scalar_select 0, %s7, %s5
  $region1: #{tpu_custom_call.1} parent=0
    #allocation2 [shape = 'u8[131072]{0}', space=vmem, size = 0x20000, scoped, tag = 'input window, operand 0, single buffered']
    #allocation3 [shape = 's32[1]{0}', space=sflag, size = 0x4, scoped, tag = 'scoped memory for tpu_custom_call.1']
    #allocation4 [shape = 's32[1]{0}', space=sflag, size = 0x4, scoped, tag = 'scoped memory for tpu_custom_call.1']
    #allocation5 [shape = 'u8[131072]{0}', space=vmem, size = 0x20000, scoped, tag = 'input window, operand 1, single buffered']
    #allocation6 [shape = 's32[1]{0}', space=sflag, size = 0x4, scoped, tag = 'scoped memory for tpu_custom_call.1']
    #allocation7 [shape = 'u8[65536]{0}', space=vmem, size = 0x10000, scoped, tag = 'output window, operand 0, single buffered']
    #allocation8 [shape = 'u8[4096]{0}', space=vmem, size = 0x1000, scoped, tag = 'output window, operand 1, single buffered']
    #allocation9 [shape = 's32[1]{0}', space=sflag, size = 0x4, scoped, tag = 'scoped memory for tpu_custom_call.1']
    %9 = vsyncpa [#allocation3], 0
    %10 = vsyncpa [#allocation6], 0
    %11 = vsyncpa [#allocation4], 0
    %12 = vsyncpa [#allocation9], 0
    // Predicated region
    $region2: #{tpu_custom_call.1} parent=1 // pred_check
      _
    $region3: #{tpu_custom_call.1} parent=1 // pred_check_branch
      %14 = sbr.rel (0) target = $region5
    $region4: #{tpu_custom_call.1} parent=1 // pred_region
      %s16 = ssub.s32 4096, 4096
      %17 = vsyncadd [#allocation3], %s16
      %s18 = sshll.u32 [#allocation2], 4
      %s19 = int_to_ptr.vmem [resolvable:$true] %s18
      %24 = dma.hbm_to_vmem [thread:$0]  %s0, 4096, %s19, [#allocation3], 256, 256, 16
    $region5: #{tpu_custom_call.1} parent=1 // pred_fallthru
      _
    // Predicated region
    $region6: #{tpu_custom_call.1} parent=1 // pred_check
      _
    $region7: #{tpu_custom_call.1} parent=1 // pred_check_branch
      %26 = sbr.rel (0) target = $region9
    $region8: #{tpu_custom_call.1} parent=1 // pred_region
      %s28 = ssub.s32 4096, 4096
      %29 = vsyncadd [#allocation6], %s28
      %s30 = sshll.u32 [#allocation5], 4
      %s31 = int_to_ptr.vmem [resolvable:$true] %s30
      %36 = dma.hbm_to_vmem [thread:$0]  %s1, 4096, %s31, [#allocation6], 128, 128, 8
    $region9: #{tpu_custom_call.1} parent=1 // pred_fallthru
      _
    // Predicated region
    $region10: #{tpu_custom_call.1} parent=1 // pred_check
      _
    $region11: #{tpu_custom_call.1} parent=1 // pred_check_branch
      %38 = sbr.rel (0) target = $region13
    $region12: #{tpu_custom_call.1} parent=1 // pred_region
      %39 = dma.done [#allocation3], 4096
    $region13: #{tpu_custom_call.1} parent=1 // pred_fallthru
      _
    // Predicated region
    $region14: #{tpu_custom_call.1} parent=1 // pred_check
      _
    $region15: #{tpu_custom_call.1} parent=1 // pred_check_branch
      %41 = sbr.rel (0) target = $region17
    $region16: #{tpu_custom_call.1} parent=1 // pred_region
      %42 = dma.done [#allocation6], 4096
    $region17: #{tpu_custom_call.1} parent=1 // pred_fallthru
      _
    %v43 = vld [vmem:[#allocation2] sm:$0xff]
    %v44 = vld [vmem:[#allocation2 + $0x8] sm:$0xff]
    %v45 = vld [vmem:[#allocation2 + $0x10] sm:$0xff]
    %v46 = vld [vmem:[#allocation2 + $0x18] sm:$0xff]
    %v47 = vld [vmem:[#allocation2 + $0x20] sm:$0xff]
    %v48 = vld [vmem:[#allocation2 + $0x28] sm:$0xff]
    %v49 = vld [vmem:[#allocation2 + $0x30] sm:$0xff]
    %v50 = vld [vmem:[#allocation2 + $0x38] sm:$0xff]
    %v51 = vld [vmem:[#allocation2 + $0x40] sm:$0xff]
    %v52 = vld [vmem:[#allocation2 + $0x48] sm:$0xff]
    %v53 = vld [vmem:[#allocation2 + $0x50] sm:$0xff]
    %v54 = vld [vmem:[#allocation2 + $0x58] sm:$0xff]
    %v55 = vld [vmem:[#allocation2 + $0x60] sm:$0xff]
    %v56 = vld [vmem:[#allocation2 + $0x68] sm:$0xff]
    %v57 = vld [vmem:[#allocation2 + $0x70] sm:$0xff]
    %v58 = vld [vmem:[#allocation2 + $0x78] sm:$0xff]
    %v59 = vld [vmem:[#allocation2 + $0x80] sm:$0xff]
    %v60 = vld [vmem:[#allocation2 + $0x88] sm:$0xff]
    %v61 = vld [vmem:[#allocation2 + $0x90] sm:$0xff]
    %v62 = vld [vmem:[#allocation2 + $0x98] sm:$0xff]
    %v63 = vld [vmem:[#allocation2 + $0xa0] sm:$0xff]
    %v64 = vld [vmem:[#allocation2 + $0xa8] sm:$0xff]
    %v65 = vld [vmem:[#allocation2 + $0xb0] sm:$0xff]
    %v66 = vld [vmem:[#allocation2 + $0xb8] sm:$0xff]
    %v67 = vld [vmem:[#allocation2 + $0xc0] sm:$0xff]
    %v68 = vld [vmem:[#allocation2 + $0xc8] sm:$0xff]
    %v69 = vld [vmem:[#allocation2 + $0xd0] sm:$0xff]
    %v70 = vld [vmem:[#allocation2 + $0xd8] sm:$0xff]
    %v71 = vld [vmem:[#allocation2 + $0xe0] sm:$0xff]
    %v72 = vld [vmem:[#allocation2 + $0xe8] sm:$0xff]
    %v73 = vld [vmem:[#allocation2 + $0xf0] sm:$0xff]
    %v74 = vld [vmem:[#allocation2 + $0xf8] sm:$0xff]
    %v75 = vld [vmem:[#allocation5] sm:$0xff]
    %v76 = vld [vmem:[#allocation5 + $0x8] sm:$0xff]
    %v77 = vld [vmem:[#allocation5 + $0x10] sm:$0xff]
    %v78 = vld [vmem:[#allocation5 + $0x18] sm:$0xff]
    %v79 = vld [vmem:[#allocation5 + $0x20] sm:$0xff]
    %v80 = vld [vmem:[#allocation5 + $0x28] sm:$0xff]
    %v81 = vld [vmem:[#allocation5 + $0x30] sm:$0xff]
    %v82 = vld [vmem:[#allocation5 + $0x38] sm:$0xff]
    %v83 = vld [vmem:[#allocation5 + $0x40] sm:$0xff]
    %v84 = vld [vmem:[#allocation5 + $0x48] sm:$0xff]
    %v85 = vld [vmem:[#allocation5 + $0x50] sm:$0xff]
    %v86 = vld [vmem:[#allocation5 + $0x58] sm:$0xff]
    %v87 = vld [vmem:[#allocation5 + $0x60] sm:$0xff]
    %v88 = vld [vmem:[#allocation5 + $0x68] sm:$0xff]
    %v89 = vld [vmem:[#allocation5 + $0x70] sm:$0xff]
    %v90 = vld [vmem:[#allocation5 + $0x78] sm:$0xff]
    %v91 = vld [vmem:[#allocation5 + $0x80] sm:$0xff]
    %v92 = vld [vmem:[#allocation5 + $0x88] sm:$0xff]
    %v93 = vld [vmem:[#allocation5 + $0x90] sm:$0xff]
    %v94 = vld [vmem:[#allocation5 + $0x98] sm:$0xff]
    %v95 = vld [vmem:[#allocation5 + $0xa0] sm:$0xff]
    %v96 = vld [vmem:[#allocation5 + $0xa8] sm:$0xff]
    %v97 = vld [vmem:[#allocation5 + $0xb0] sm:$0xff]
    %v98 = vld [vmem:[#allocation5 + $0xb8] sm:$0xff]
    %v99 = vld [vmem:[#allocation5 + $0xc0] sm:$0xff]
    %v100 = vld [vmem:[#allocation5 + $0xc8] sm:$0xff]
    %v101 = vld [vmem:[#allocation5 + $0xd0] sm:$0xff]
    %v102 = vld [vmem:[#allocation5 + $0xd8] sm:$0xff]
    %v103 = vld [vmem:[#allocation5 + $0xe0] sm:$0xff]
    %v104 = vld [vmem:[#allocation5 + $0xe8] sm:$0xff]
    %v105 = vld [vmem:[#allocation5 + $0xf0] sm:$0xff]
    %v106 = vld [vmem:[#allocation5 + $0xf8] sm:$0xff]
    %107 = vmatprep.subr.mxu0 0.0
    %108 = vmatpush1.msra.mxu0 %v75
    %109 = vmatprep.subr.mxu0 0.0
    %110 = vmatpush1.msra.mxu0 %v76
    %111 = vmatprep.subr.mxu0 0.0
    %112 = vmatpush1.msra.mxu0 %v77
    %113 = vmatprep.subr.mxu0 0.0
    %114 = vmatpush1.msra.mxu0 %v78
    %115 = vmatprep.subr.mxu0 0.0
    %116 = vmatpush1.msra.mxu0 %v79
    %117 = vmatprep.subr.mxu0 0.0
    %118 = vmatpush1.msra.mxu0 %v80
    %119 = vmatprep.subr.mxu0 0.0
    %120 = vmatpush1.msra.mxu0 %v81
    %121 = vmatprep.subr.mxu0 0.0
    %122 = vmatpush1.msra.mxu0 %v82
    %123 = vmatprep.subr.mxu0 0.0
    %124 = vmatpush1.msra.mxu0 %v83
    %125 = vmatprep.subr.mxu0 0.0
    %126 = vmatpush1.msra.mxu0 %v84
    %127 = vmatprep.subr.mxu0 0.0
    %128 = vmatpush1.msra.mxu0 %v85
    %129 = vmatprep.subr.mxu0 0.0
    %130 = vmatpush1.msra.mxu0 %v86
    %131 = vmatprep.subr.mxu0 0.0
    %132 = vmatpush1.msra.mxu0 %v87
    %133 = vmatprep.subr.mxu0 0.0
    %134 = vmatpush1.msra.mxu0 %v88
    %135 = vmatprep.subr.mxu0 0.0
    %136 = vmatpush1.msra.mxu0 %v89
    %137 = vmatprep.subr.mxu0 0.0
    %138 = vmatpush1.msra.mxu0 %v90
    %139 = vmatprep.subr.mxu0 0.0
    %140 = vmatpush1.msra.mxu0 %v91
    %141 = vmatprep.subr.mxu0 0.0
    %142 = vmatpush1.msra.mxu0 %v92
    %143 = vmatprep.subr.mxu0 0.0
    %144 = vmatpush1.msra.mxu0 %v93
    %145 = vmatprep.subr.mxu0 0.0
    %146 = vmatpush1.msra.mxu0 %v94
    %147 = vmatprep.subr.mxu0 0.0
    %148 = vmatpush1.msra.mxu0 %v95
    %149 = vmatprep.subr.mxu0 0.0
    %150 = vmatpush1.msra.mxu0 %v96
    %151 = vmatprep.subr.mxu0 0.0
    %152 = vmatpush1.msra.mxu0 %v97
    %153 = vmatprep.subr.mxu0 0.0
    %154 = vmatpush1.msra.mxu0 %v98
    %155 = vmatprep.subr.mxu0 0.0
    %156 = vmatpush1.msra.mxu0 %v99
    %157 = vmatprep.subr.mxu0 0.0
    %158 = vmatpush1.msra.mxu0 %v100
    %159 = vmatprep.subr.mxu0 0.0
    %160 = vmatpush1.msra.mxu0 %v101
    %161 = vmatprep.subr.mxu0 0.0
    %162 = vmatpush1.msra.mxu0 %v102
    %163 = vmatprep.subr.mxu0 0.0
    %164 = vmatpush1.msra.mxu0 %v103
    %165 = vmatprep.subr.mxu0 0.0
    %166 = vmatpush1.msra.mxu0 %v104
    %167 = vmatprep.subr.mxu0 0.0
    %168 = vmatpush1.msra.mxu0 %v105
    %169 = vmatprep.subr.mxu0 0.0
    %170 = vmatpush1.msra.mxu0 %v106
    %171 = vmatprep.mubr.f32.mxu0 %v44
    %172 = vmatmul.mubr.f32.gmra.mrb[0].mxu0 %v43
    %v173 = vpop.f32.mrb[0].mxu0
    %v174 = vadd.f32 0.0, %v173
    %v175 = vpop.f32.mrb[0].mxu0
    %176 = vmatprep.mubr.f32.mxu0 %v46
    %177 = vmatmul.mubr.f32.gmra.mrb[0].mxu0 %v45
    %v178 = vpop.f32.mrb[0].mxu0
    %v179 = vadd.f32 0.0, %v178
    %v180 = vpop.f32.mrb[0].mxu0
    %181 = vmatprep.mubr.f32.mxu0 %v48
    %182 = vmatmul.mubr.f32.gmra.mrb[0].mxu0 %v47
    %v183 = vpop.f32.mrb[0].mxu0
    %v184 = vadd.f32 0.0, %v183
    %v185 = vpop.f32.mrb[0].mxu0
    %186 = vmatprep.mubr.f32.mxu0 %v50
    %187 = vmatmul.mubr.f32.gmra.mrb[0].mxu0 %v49
    %v188 = vpop.f32.mrb[0].mxu0
    %v189 = vadd.f32 0.0, %v188
    %v190 = vpop.f32.mrb[0].mxu0
    %191 = vmatprep.mubr.f32.mxu0 %v52
    %192 = vmatmul.mubr.f32.gmra.mrb[0].mxu0 %v51
    %v193 = vpop.f32.mrb[0].mxu0
    %v194 = vadd.f32 0.0, %v193
    %v195 = vpop.f32.mrb[0].mxu0
    %196 = vmatprep.mubr.f32.mxu0 %v54
    %197 = vmatmul.mubr.f32.gmra.mrb[0].mxu0 %v53
    %v198 = vpop.f32.mrb[0].mxu0
    %v199 = vadd.f32 0.0, %v198
    %v200 = vpop.f32.mrb[0].mxu0
    %201 = vmatprep.mubr.f32.mxu0 %v56
    %202 = vmatmul.mubr.f32.gmra.mrb[0].mxu0 %v55
    %v203 = vpop.f32.mrb[0].mxu0
    %v204 = vadd.f32 0.0, %v203
    %v205 = vpop.f32.mrb[0].mxu0
    %206 = vmatprep.mubr.f32.mxu0 %v58
    %207 = vmatmul.mubr.f32.gmra.mrb[0].mxu0 %v57
    %v208 = vpop.f32.mrb[0].mxu0
    %v209 = vadd.f32 0.0, %v208
    %v210 = vpop.f32.mrb[0].mxu0
    %211 = vmatprep.mubr.f32.mxu0 %v60
    %212 = vmatmul.mubr.f32.gmra.mrb[0].mxu0 %v59
    %v213 = vpop.f32.mrb[0].mxu0
    %v214 = vadd.f32 0.0, %v213
    %v215 = vpop.f32.mrb[0].mxu0
    %216 = vmatprep.mubr.f32.mxu0 %v62
    %217 = vmatmul.mubr.f32.gmra.mrb[0].mxu0 %v61
    %v218 = vpop.f32.mrb[0].mxu0
    %v219 = vadd.f32 0.0, %v218
    %v220 = vpop.f32.mrb[0].mxu0
    %221 = vmatprep.mubr.f32.mxu0 %v64
    %222 = vmatmul.mubr.f32.gmra.mrb[0].mxu0 %v63
    %v223 = vpop.f32.mrb[0].mxu0
    %v224 = vadd.f32 0.0, %v223
    %v225 = vpop.f32.mrb[0].mxu0
    %226 = vmatprep.mubr.f32.mxu0 %v66
    %227 = vmatmul.mubr.f32.gmra.mrb[0].mxu0 %v65
    %v228 = vpop.f32.mrb[0].mxu0
    %v229 = vadd.f32 0.0, %v228
    %v230 = vpop.f32.mrb[0].mxu0
    %231 = vmatprep.mubr.f32.mxu0 %v68
    %232 = vmatmul.mubr.f32.gmra.mrb[0].mxu0 %v67
    %v233 = vpop.f32.mrb[0].mxu0
    %v234 = vadd.f32 0.0, %v233
    %v235 = vpop.f32.mrb[0].mxu0
    %236 = vmatprep.mubr.f32.mxu0 %v70
    %237 = vmatmul.mubr.f32.gmra.mrb[0].mxu0 %v69
    %v238 = vpop.f32.mrb[0].mxu0
    %v239 = vadd.f32 0.0, %v238
    %v240 = vpop.f32.mrb[0].mxu0
    %241 = vmatprep.mubr.f32.mxu0 %v72
    %242 = vmatmul.mubr.f32.gmra.mrb[0].mxu0 %v71
    %v243 = vpop.f32.mrb[0].mxu0
    %v244 = vadd.f32 0.0, %v243
    %v245 = vpop.f32.mrb[0].mxu0
    %246 = vmatprep.mubr.f32.mxu0 %v74
    %247 = vmatmul.mubr.f32.gmra.mrb[0].mxu0 %v73
    %v248 = vpop.f32.mrb[0].mxu0
    %v249 = vadd.f32 0.0, %v248
    %v250 = vpop.f32.mrb[0].mxu0
    %251 = vdwg.mxu0
    %252 = vst [vmem:[#allocation7] sm:$0xff] %v174
    %253 = vst [vmem:[#allocation7 + $0x8] sm:$0xff] %v179
    %254 = vst [vmem:[#allocation7 + $0x10] sm:$0xff] %v184
    %255 = vst [vmem:[#allocation7 + $0x18] sm:$0xff] %v189
    %256 = vst [vmem:[#allocation7 + $0x20] sm:$0xff] %v194
    %257 = vst [vmem:[#allocation7 + $0x28] sm:$0xff] %v199
    %258 = vst [vmem:[#allocation7 + $0x30] sm:$0xff] %v204
    %259 = vst [vmem:[#allocation7 + $0x38] sm:$0xff] %v209
    %260 = vst [vmem:[#allocation7 + $0x40] sm:$0xff] %v214
    %261 = vst [vmem:[#allocation7 + $0x48] sm:$0xff] %v219
    %262 = vst [vmem:[#allocation7 + $0x50] sm:$0xff] %v224
    %263 = vst [vmem:[#allocation7 + $0x58] sm:$0xff] %v229
    %264 = vst [vmem:[#allocation7 + $0x60] sm:$0xff] %v234
    %265 = vst [vmem:[#allocation7 + $0x68] sm:$0xff] %v239
    %266 = vst [vmem:[#allocation7 + $0x70] sm:$0xff] %v244
    %267 = vst [vmem:[#allocation7 + $0x78] sm:$0xff] %v249
    %v268 = vadd.f32 %v174, %v179
    %v269 = vadd.f32 %v268, %v184
    %v270 = vadd.f32 %v269, %v189
    %v271 = vadd.f32 %v270, %v194
    %v272 = vadd.f32 %v271, %v199
    %v273 = vadd.f32 %v272, %v204
    %v274 = vadd.f32 %v273, %v209
    %v275 = vadd.f32 %v274, %v214
    %v276 = vadd.f32 %v275, %v219
    %v277 = vadd.f32 %v276, %v224
    %v278 = vadd.f32 %v277, %v229
    %v279 = vadd.f32 %v278, %v234
    %v280 = vadd.f32 %v279, %v239
    %v281 = vadd.f32 %v280, %v244
    %v282 = vadd.f32 %v281, %v249
    %v283 = vrot.slane %v282, 4
    %v284 = vadd.f32 %v282, %v283
    %v285 = vrot.slane %v284, 2
    %v286 = vadd.f32 %v284, %v285
    %v287 = vrot.slane %v286, 1
    %v288 = vadd.f32 %v286, %v287
    %v289 = vmul.f32 %v174, %v174
    %v290 = vmul.f32 %v179, %v179
    %v291 = vmul.f32 %v184, %v184
    %v292 = vmul.f32 %v189, %v189
    %v293 = vmul.f32 %v194, %v194
    %v294 = vmul.f32 %v199, %v199
    %v295 = vmul.f32 %v204, %v204
    %v296 = vmul.f32 %v209, %v209
    %v297 = vmul.f32 %v214, %v214
    %v298 = vmul.f32 %v219, %v219
    %v299 = vmul.f32 %v224, %v224
    %v300 = vmul.f32 %v229, %v229
    %v301 = vmul.f32 %v234, %v234
    %v302 = vmul.f32 %v239, %v239
    %v303 = vmul.f32 %v244, %v244
    %v304 = vmul.f32 %v249, %v249
    %v305 = vadd.f32 %v289, %v290
    %v306 = vadd.f32 %v305, %v291
    %v307 = vadd.f32 %v306, %v292
    %v308 = vadd.f32 %v307, %v293
    %v309 = vadd.f32 %v308, %v294
    %v310 = vadd.f32 %v309, %v295
    %v311 = vadd.f32 %v310, %v296
    %v312 = vadd.f32 %v311, %v297
    %v313 = vadd.f32 %v312, %v298
    %v314 = vadd.f32 %v313, %v299
    %v315 = vadd.f32 %v314, %v300
    %v316 = vadd.f32 %v315, %v301
    %v317 = vadd.f32 %v316, %v302
    %v318 = vadd.f32 %v317, %v303
    %v319 = vadd.f32 %v318, %v304
    %v320 = vrot.slane %v319, 4
    %v321 = vadd.f32 %v319, %v320
    %v322 = vrot.slane %v321, 2
    %v323 = vadd.f32 %v321, %v322
    %v324 = vrot.slane %v323, 1
    %v325 = vadd.f32 %v323, %v324
    %vm326 = vcmask 1040384
    %v327 = vsel %vm326, %v288, %v325
    %vm328 = vcmask 1041408
    %v329 = vsel %vm328, %v327, 0.0
    %330 = vst [vmem:[#allocation8] sm:$0xff] %v329
    // Predicated region
    $region18: #{tpu_custom_call.1} parent=1 // pred_check
      _
    $region19: #{tpu_custom_call.1} parent=1 // pred_check_branch
      %332 = sbr.rel (0) target = $region21
    $region20: #{tpu_custom_call.1} parent=1 // pred_region
      %s334 = ssub.s32 2048, 2048
      %335 = vsyncadd [#allocation4], %s334
      %s336 = sshll.u32 [#allocation7], 4
      %s337 = int_to_ptr.vmem [resolvable:$true] %s336
      %342 = dma.vmem_to_hbm [thread:$0]  %s337, 2048, %s2, [#allocation4], 128, 128, 8
    $region21: #{tpu_custom_call.1} parent=1 // pred_fallthru
      _
    // Predicated region
    $region22: #{tpu_custom_call.1} parent=1 // pred_check
      _
    $region23: #{tpu_custom_call.1} parent=1 // pred_check_branch
      %344 = sbr.rel (0) target = $region25
    $region24: #{tpu_custom_call.1} parent=1 // pred_region
      %s346 = ssub.s32 128, 128
      %347 = vsyncadd [#allocation9], %s346
      %s349 = sshll.u32 [#allocation8], 4
      %s350 = int_to_ptr.vmem [resolvable:$true] %s349
      %352 = dma.vmem_to_hbm [thread:$0]  %s350, 128, %s3, [#allocation9]
    $region25: #{tpu_custom_call.1} parent=1 // pred_fallthru
      _
    // Predicated region
    $region26: #{tpu_custom_call.1} parent=1 // pred_check
      _
    $region27: #{tpu_custom_call.1} parent=1 // pred_check_branch
      %354 = sbr.rel (0) target = $region29
    $region28: #{tpu_custom_call.1} parent=1 // pred_region
      %355 = dma.done [#allocation4], 2048
    $region29: #{tpu_custom_call.1} parent=1 // pred_fallthru
      _
    // Predicated region
    $region30: #{tpu_custom_call.1} parent=1 // pred_check
      _
    $region31: #{tpu_custom_call.1} parent=1 // pred_check_branch
      %357 = sbr.rel (0) target = $region33
    $region32: #{tpu_custom_call.1} parent=1 // pred_region
      %358 = dma.done [#allocation9], 128
    $region33: #{tpu_custom_call.1} parent=1 // pred_fallthru
      _
    %359 = vsyncpa [#allocation3], 1
    %360 = vsyncpa [#allocation6], 1
    %361 = vsyncpa [#allocation4], 1
    %362 = vsyncpa [#allocation9], 1

</llo_original>
